<compile_context>
chip_gen: v5e
topology: v5e:2x2
jax: 0.10.0
libtpu: 0.0.40
codegen_flags: <defaults>
</compile_context>

<pallas_src>
import math
from functools import partial

import jax
import jax.numpy as jnp
from jax.experimental import pallas as pl
from jax.experimental.pallas import tpu as pltpu


# ----------------------------------------------------------------------------
# Elementwise helpers (guaranteed to lower on Mosaic)
# ----------------------------------------------------------------------------
def _erf_poly(x):
    """Abramowitz & Stegun 7.1.26 erf approximation, |err| < 1.5e-7 (in f32)."""
    a1, a2, a3, a4, a5 = (0.254829592, -0.284496736, 1.421413741,
                          -1.453152027, 1.061405429)
    p = 0.3275911
    sgn = jnp.where(x >= 0, 1.0, -1.0).astype(x.dtype)
    ax = jnp.abs(x)
    t = 1.0 / (1.0 + p * ax)
    poly = ((((a5 * t + a4) * t + a3) * t + a2) * t + a1) * t
    return sgn * (1.0 - poly * jnp.exp(-ax * ax))


def _gelu_exact(x):
    """Exact (erf-based) GELU, matching PyTorch nn.GELU() default."""
    return 0.5 * x * (1.0 + _erf_poly(x * (1.0 / math.sqrt(2.0))))


def _gelu_tanh(x):
    """tanh-approximate GELU: transcendental lands on the EUP slot (cheap VALU)."""
    c = math.sqrt(2.0 / math.pi)
    return 0.5 * x * (1.0 + jnp.tanh(c * (x + 0.044715 * x * x * x)))


# ----------------------------------------------------------------------------
# One-time lazy probe: lock the kernel to jnp.roll's direction convention.
# Robust to no-device / AOT / interpret environments: falls back to the
# documented tpu.RotateOp (== jnp.roll) convention instead of raising.
# ----------------------------------------------------------------------------
_ROLL_SIGN = []


def _roll_sign():
    if not _ROLL_SIGN:
        sign = 1                                  # jnp.roll convention by default
        try:
            def probe(x_ref, o_ref):
                o_ref[...] = pltpu.roll(x_ref[...], 1, axis=1)

            x = jax.lax.broadcasted_iota(jnp.float32, (8, 128), 1)
            y = jax.block_until_ready(
                pl.pallas_call(
                    probe,
                    out_shape=jax.ShapeDtypeStruct((8, 128), jnp.float32))(x))
            if int(round(float(y[0, 1]))) == 2:   # opposite convention
                sign = -1
        except Exception:
            pass                                  # keep jnp.roll convention
        _ROLL_SIGN.append(sign)
    return _ROLL_SIGN[0]


# ----------------------------------------------------------------------------
# Pallas kernel: one batch tile (Bt batch elements, lane width Nt = Bt*L) per step
# ----------------------------------------------------------------------------
def _residual_block_kernel(*refs, K, pad, L, roll_sign, identity_skip,
                           use_tanh_gelu):
    if identity_skip:
        pos_ref, x_ref, w1_ref, b1_ref, w2_ref, b2_ref, o_ref = refs
        ws_ref = bs_ref = None
    else:
        (pos_ref, x_ref, w1_ref, b1_ref, w2_ref, b2_ref,
         ws_ref, bs_ref, o_ref) = refs

    Nt = x_ref.shape[1]          # lane width of this tile (multiple of 128)
    cdt = x_ref.dtype            # compute dtype (bf16 or f32)
    gelu = _gelu_tanh if use_tanh_gelu else _gelu_exact

    pos = pos_ref[...]           # (1, Nt) int32: lane position in its length-L segment

    # Hoisted segment-validity masks: one compare per nonzero tap shift, shared by
    # BOTH conv tap constructions (JAX does not CSE these).
    shifts = [pad - k for k in range(K)]
    masks = {s: ((pos >= s) if s > 0 else (pos < L + s))
             for s in shifts if s != 0}

    def taps(v):
        """(C, Nt) -> (K*C, Nt): K lane-shifted copies, zeroed across segment borders."""
        zero = jnp.zeros((), v.dtype)
        pieces = []
        for s in shifts:                          # shifted[:, j] = v[:, j - s]
            if s == 0:
                pieces.append(v)
            else:
                rolled = pltpu.roll(v, (roll_sign * s) % Nt, axis=1)   # XLU rotate
                pieces.append(jnp.where(masks[s], rolled, zero))
        return jnp.concatenate(pieces, axis=0)    # aligned: C % sublane-pack == 0

    x_c = x_ref[...]                              # (Cin, Nt), already compute dtype

    # ---- conv1 + folded BN1: one fused im2col matmul, f32 accumulation, f32 bias
    pre1 = (jnp.dot(w1_ref[...], taps(x_c), preferred_element_type=jnp.float32)
            + b1_ref[...])
    h1 = gelu(pre1.astype(cdt))                   # GELU; Dropout == identity (eval)

    # ---- conv2 + folded BN2
    pre2 = (jnp.dot(w2_ref[...], taps(h1), preferred_element_type=jnp.float32)
            + b2_ref[...])

    # ---- skip path
    if identity_skip:
        skip = x_c                                # no eye() matmul, no extra DMA
    else:
        skip = (jnp.dot(ws_ref[...], x_c, preferred_element_type=jnp.float32)
                + bs_ref[...])

    o_ref[...] = gelu((pre2 + skip).astype(cdt)).astype(o_ref.dtype)


# ----------------------------------------------------------------------------
# Wrapper: BN folding, weight flattening, lane-dense VMEM-aware batch tiling
# ----------------------------------------------------------------------------
def _ceil_to(n, m):
    return -(-n // m) * m


def _fold_conv_bn(W, b, gamma, beta, mean, var, eps=1e-5):
    """Fold eval-mode BatchNorm into the preceding conv (W: (O, I, K))."""
    s = gamma / jnp.sqrt(var + eps)
    return W * s[:, None, None], s * (b - mean) + beta


def _vmem_limit_bytes():
    """Generation-aware VMEM limit with headroom for Mosaic internal scratch."""
    cap = 64 * 1024 * 1024                        # conservative fallback (v7x physical)
    try:
        info = pltpu.get_tpu_info()
        cap = int(getattr(info, "vmem_capacity_bytes", cap) or cap)
    except Exception:
        pass
    # ~85% of physical: ~54 MiB on v7x (64 MiB), ~109 MiB on v5e/v6e (128 MiB).
    return int(min(max(int(cap * 0.85), 32 * 1024 * 1024), 112 * 1024 * 1024))


def residual_block_forward(x, params, *, kernel_size=3,
                           compute_dtype=jnp.bfloat16,
                           lane_tile_target=4096,
                           gelu_approximate=False):
    """Inference-mode ResidualBlock forward, NCL layout like nn.Conv1d.

    compute_dtype=jnp.float32 gives strict PyTorch-parity numerics; the bf16
    default streams x / weights in bf16 with f32 accumulation and f32 biases.
    """
    assert kernel_size % 2 == 1, "only odd kernel sizes give 'same' output length"
    B, Cin, L = x.shape
    K = kernel_size
    pad = K // 2
    cdt = jnp.dtype(compute_dtype)

    # ---- fold eval-mode BatchNorm into the convolutions (plain-JAX glue) -----
    W1f, b1f = _fold_conv_bn(params["W1"], params["b1"], params["g1"],
                             params["be1"], params["mu1"], params["var1"])
    W2f, b2f = _fold_conv_bn(params["W2"], params["b2"], params["g2"],
                             params["be2"], params["mu2"], params["var2"])
    Cout = W1f.shape[0]
    identity_skip = "Ws" not in params

    # ---- pad channels to sublane-pack multiples: aligned sublane stacking -----
    mult = 16 if cdt.itemsize == 2 else 8
    Cin8, Cout8 = _ceil_to(Cin, mult), _ceil_to(Cout, mult)

    def pad_oik(W, Co, Ci):                        # (O, I, K) -> (Co, Ci, K)
        return jnp.pad(W, ((0, Co - W.shape[0]), (0, Ci - W.shape[1]), (0, 0)))

    def flat_w(Wp):                                # (Co, C, K) -> (Co, K*C) taps
        Co, C, _ = Wp.shape
        return jnp.transpose(Wp, (0, 2, 1)).reshape(Co, K * C).astype(cdt)

    def pad_bias(b):                               # f32 (Cout8, 1) column (kept f32)
        return jnp.pad(b, (0, Cout8 - b.shape[0])).astype(jnp.float32)[:, None]

    w1 = flat_w(pad_oik(W1f, Cout8, Cin8))         # (Cout8, K*Cin8)
    w2 = flat_w(pad_oik(W2f, Cout8, Cout8))        # (Cout8, K*Cout8)
    b1, b2 = pad_bias(b1f), pad_bias(b2f)

    if not identity_skip:
        Wsf, bsf = _fold_conv_bn(params["Ws"], jnp.zeros((Cout,), jnp.float32),
                                 params["gs"], params["bes"],
                                 params["mus"], params["vars"])
        ws = jnp.pad(Wsf[:, :, 0],
                     ((0, Cout8 - Cout), (0, Cin8 - Cin))).astype(cdt)
        bs = pad_bias(bsf)

    # ---- batch tiling: Bt batch elements per grid step, lanes always % 128 ----
    cd_size = cdt.itemsize
    out_size = jnp.dtype(x.dtype).itemsize
    g = math.lcm(L, 128) // L                      # batch granule: (g*L) % 128 == 0

    # Rough per-lane VMEM cost: double-buffered x/out blocks + in-kernel tensors.
    bytes_per_lane = (
        2 * Cin8 * cd_size                         # x slab (double-buffered)
        + 2 * Cout8 * out_size                     # output slab (double-buffered)
        + K * Cin8 * cd_size                       # rhs1 (stacked taps of x)
        + K * Cout8 * cd_size                      # rhs2 (stacked taps of h1)
        + Cout8 * (4 + cd_size + 4 + 4)            # pre1 + h1 + pre2 + skip/acc
        + Cin8 * cd_size                           # rolled-tap temporary
        + 2 * 4                                    # pos
    )
    vmem_limit = _vmem_limit_bytes()
    max_lanes = max(g * L, int(vmem_limit * 0.7) // max(bytes_per_lane, 1))
    lane_target = min(lane_tile_target, max_lanes)

    Bt = max(g, (lane_target // (g * L)) * g)
    Bt = min(Bt, _ceil_to(B, g))                   # don't tile beyond padded batch
    Bp = _ceil_to(B, Bt)
    # Keep >= 2 grid steps when worthwhile so v7x's two TensorCores both get work
    # (extra steps are ~free once tiles are >= ~1024 lanes).
    if Bp // Bt == 1 and Bp // g >= 2:
        half = _ceil_to(-(-Bp // 2), g)
        if half < Bt and half * L >= 1024:
            Bt = half
            Bp = _ceil_to(B, Bt)
    Nt = Bt * L

    xb = x if Bp == B else jnp.pad(x, ((0, Bp - B), (0, 0), (0, 0)))
    # NCL -> (Cin8, Bp*L): channels on sublanes; lanes = (batch-major, L-minor).
    # Streamed at compute_dtype (halves HBM traffic and VMEM in bf16 mode).
    x2d = jnp.pad(jnp.transpose(xb, (1, 0, 2)).reshape(Cin, Bp * L),
                  ((0, Cin8 - Cin), (0, 0))).astype(cdt)

    # Lane position inside its length-L segment (identical for every tile).
    pos = jnp.tile(jnp.arange(L, dtype=jnp.int32), Bt).reshape(1, Nt)

    kernel = partial(_residual_block_kernel, K=K, pad=pad, L=L,
                     roll_sign=_roll_sign(), identity_skip=identity_skip,
                     use_tanh_gelu=gelu_approximate)

    in_specs = [
        pl.BlockSpec((1, Nt), lambda i: (0, 0)),          # pos   (grid-resident)
        pl.BlockSpec((Cin8, Nt), lambda i: (0, i)),       # x slab tile
        pl.BlockSpec(w1.shape, lambda i: (0, 0)),         # w1    (grid-resident)
        pl.BlockSpec(b1.shape, lambda i: (0, 0)),         # b1 f32
        pl.BlockSpec(w2.shape, lambda i: (0, 0)),         # w2
        pl.BlockSpec(b2.shape, lambda i: (0, 0)),         # b2 f32
    ]
    args = [pos, x2d, w1, b1, w2, b2]
    if not identity_skip:
        in_specs += [pl.BlockSpec(ws.shape, lambda i: (0, 0)),
                     pl.BlockSpec(bs.shape, lambda i: (0, 0))]
        args += [ws, bs]

    out2d = pl.pallas_call(
        kernel,
        out_shape=jax.ShapeDtypeStruct((Cout8, Bp * L), x.dtype),
        grid_spec=pltpu.PrefetchScalarGridSpec(
            num_scalar_prefetch=0,
            grid=(Bp // Bt,),
            in_specs=in_specs,
            out_specs=pl.BlockSpec((Cout8, Nt), lambda i: (0, i)),
        ),
        compiler_params=pltpu.CompilerParams(
            dimension_semantics=("parallel",),            # batch tiles across TCs
            vmem_limit_bytes=vmem_limit,                  # generation-aware, with headroom
        ),
    )(*args)

    # (Cout8, Bp*L) -> (B, Cout, L)
    return jnp.transpose(out2d.reshape(Cout8, Bp, L), (1, 0, 2))[:B, :Cout, :]


# ----------------------------------------------------------------------------
# Deterministic parameter init (shapes per the PyTorch module __init__)
# ----------------------------------------------------------------------------
def init_params(key, in_channels, out_channels, kernel_size=3):
    ks = jax.random.split(key, 16)

    def conv_w(k, o, i, ksz):
        bound = 1.0 / math.sqrt(i * ksz)
        return jax.random.uniform(k, (o, i, ksz), jnp.float32, -bound, bound)

    def conv_b(k, o, i, ksz):
        bound = 1.0 / math.sqrt(i * ksz)
        return jax.random.uniform(k, (o,), jnp.float32, -bound, bound)

    def bn(k, c):
        k1, k2, k3, k4 = jax.random.split(k, 4)
        return (jax.random.uniform(k1, (c,), jnp.float32, 0.5, 1.5),   # gamma
                0.1 * jax.random.normal(k2, (c,), jnp.float32),        # beta
                0.1 * jax.random.normal(k3, (c,), jnp.float32),        # running mean
                jax.random.uniform(k4, (c,), jnp.float32, 0.5, 1.5))   # running var

    p = {}
    p["W1"] = conv_w(ks[0], out_channels, in_channels, kernel_size)
    p["b1"] = conv_b(ks[1], out_channels, in_channels, kernel_size)
    p["g1"], p["be1"], p["mu1"], p["var1"] = bn(ks[2], out_channels)
    p["W2"] = conv_w(ks[3], out_channels, out_channels, kernel_size)
    p["b2"] = conv_b(ks[4], out_channels, out_channels, kernel_size)
    p["g2"], p["be2"], p["mu2"], p["var2"] = bn(ks[5], out_channels)
    if in_channels != out_channels:
        p["Ws"] = conv_w(ks[6], out_channels, in_channels, 1)          # bias=False
        p["gs"], p["bes"], p["mus"], p["vars"] = bn(ks[7], out_channels)
    return p


# ----------------------------------------------------------------------------
# Pure-JAX reference (unfolded params, lax.conv + exact GELU) for verification
# ----------------------------------------------------------------------------
def reference_forward(x, p, kernel_size=3, eps=1e-5):
    pad = kernel_size // 2

    def conv1d(x_, w, b=None, padding=pad):
        y = jax.lax.conv_general_dilated(
            x_, w, window_strides=(1,), padding=[(padding, padding)],
            dimension_numbers=("NCH", "OIH", "NCH"))
        return y if b is None else y + b[None, :, None]

    def bn_eval(h, g, be, mu, var):
        return ((h - mu[None, :, None]) / jnp.sqrt(var[None, :, None] + eps)
                * g[None, :, None] + be[None, :, None])

    h = conv1d(x, p["W1"], p["b1"])
    h = bn_eval(h, p["g1"], p["be1"], p["mu1"], p["var1"])
    h = jax.nn.gelu(h, approximate=False)          # dropout = identity (eval)
    h = conv1d(h, p["W2"], p["b2"])
    h = bn_eval(h, p["g2"], p["be2"], p["mu2"], p["var2"])
    if "Ws" in p:
        sk = conv1d(x, p["Ws"], None, padding=0)
        sk = bn_eval(sk, p["gs"], p["bes"], p["mus"], p["vars"])
    else:
        sk = x
    return jax.nn.gelu(h + sk, approximate=False)


# ----------------------------------------------------------------------------
if __name__ == "__main__":
    key = jax.random.PRNGKey(0)
    k_x1, k_p1, k_x2, k_p2, k_x3, k_p3 = jax.random.split(key, 6)
    K = 3

    # Case 1: in_channels != out_channels (1x1-conv + BN skip path)
    B, Cin, Cout, L = 2, 4, 8, 16
    x1 = jax.random.normal(k_x1, (B, Cin, L), jnp.float32)
    p1 = init_params(k_p1, Cin, Cout, K)
    ref1 = jax.block_until_ready(reference_forward(x1, p1, kernel_size=K))

    # (a) f32 MXU inputs -> strict parity with the reference
    out1_f32 = jax.block_until_ready(
        residual_block_forward(x1, p1, kernel_size=K, compute_dtype=jnp.float32))
    assert out1_f32.shape == (B, Cout, L), out1_f32.shape
    assert jnp.allclose(out1_f32, ref1, atol=1e-4, rtol=1e-4), \
        float(jnp.max(jnp.abs(out1_f32 - ref1)))

    # (b) bf16 MXU/VPU inputs (default) with f32 accumulation -> looser tolerance
    out1_bf16 = jax.block_until_ready(
        residual_block_forward(x1, p1, kernel_size=K))
    err_bf16 = float(jnp.max(jnp.abs(out1_bf16 - ref1)))
    assert err_bf16 < 0.5, err_bf16

    # (c) tanh-approximate GELU (EUP path) -> small, bounded deviation from erf
    out1_tanh = jax.block_until_ready(
        residual_block_forward(x1, p1, kernel_size=K, compute_dtype=jnp.float32,
                               gelu_approximate=True))
    err_tanh = float(jnp.max(jnp.abs(out1_tanh - ref1)))
    assert err_tanh < 0.05, err_tanh

    # Case 2: in_channels == out_channels (identity skip, no 1x1 conv matmul)
    B2, C2, L2 = 2, 8, 16
    x2 = jax.random.normal(k_x2, (B2, C2, L2), jnp.float32)
    p2 = init_params(k_p2, C2, C2, K)
    ref2 = jax.block_until_ready(reference_forward(x2, p2, kernel_size=K))
    out2 = jax.block_until_ready(
        residual_block_forward(x2, p2, kernel_size=K, compute_dtype=jnp.float32))
    assert jnp.allclose(out2, ref2, atol=1e-4, rtol=1e-4), \
        float(jnp.max(jnp.abs(out2 - ref2)))

    # Case 3: larger batch -> multi-step "parallel" grid (>= 2 tiles, 1024 lanes each)
    B3, Cin3, Cout3, L3 = 128, 8, 16, 16
    x3 = jax.random.normal(k_x3, (B3, Cin3, L3), jnp.float32)
    p3 = init_params(k_p3, Cin3, Cout3, K)
    ref3 = jax.block_until_ready(reference_forward(x3, p3, kernel_size=K))
    out3 = jax.block_until_ready(
        residual_block_forward(x3, p3, kernel_size=K, compute_dtype=jnp.float32))
    assert jnp.allclose(out3, ref3, atol=1e-4, rtol=1e-4), \
        float(jnp.max(jnp.abs(out3 - ref3)))

    print("KERNEL_OK")
</pallas_src>

<mosaic_0001>
module attributes {stable_mosaic.version = 11 : i64} {
  func.func @probe(%arg0: memref<8x128xf32, #tpu.memory_space<vmem>>, %arg1: memref<8x128xf32, #tpu.memory_space<vmem>>) attributes {dimension_semantics = [], scalar_prefetch = 0 : i64, scratch_operands = 0 : i64, tpu.core_type = #tpu.core_type<tc>} {
    %c0 = arith.constant 0 : index
    %c0_0 = arith.constant 0 : index
    %0 = vector.load %arg0[%c0, %c0_0] : memref<8x128xf32, #tpu.memory_space<vmem>>, vector<8x128xf32>
    %c1_i32 = arith.constant 1 : i32
    %1 = tpu.dynamic_rotate %0 by %c1_i32 dim 1 : vector<8x128xf32>, i32 -> vector<8x128xf32>
    %c0_1 = arith.constant 0 : index
    %c0_2 = arith.constant 0 : index
    %2 = vector.load %arg1[%c0_1, %c0_2] : memref<8x128xf32, #tpu.memory_space<vmem>>, vector<8x128xf32>
    tpu.vector_store %arg1[%c0_1, %c0_2], %1 {strides = array<i32>} : memref<8x128xf32, #tpu.memory_space<vmem>>, vector<8x128xf32>,
    return
  }
}

module attributes {stable_mosaic.version = 11 : i64} {
  func.func @_residual_block_kernel(%arg0: i32, %arg1: memref<1x128xi32, #tpu.memory_space<vmem>>, %arg2: memref<8x128xf32, #tpu.memory_space<vmem>>, %arg3: memref<8x24xf32, #tpu.memory_space<vmem>>, %arg4: memref<8x1xf32, #tpu.memory_space<vmem>>, %arg5: memref<8x24xf32, #tpu.memory_space<vmem>>, %arg6: memref<8x1xf32, #tpu.memory_space<vmem>>, %arg7: memref<8x8xf32, #tpu.memory_space<vmem>>, %arg8: memref<8x1xf32, #tpu.memory_space<vmem>>, %arg9: memref<8x128xf32, #tpu.memory_space<vmem>>) attributes {dimension_semantics = [#tpu.dimension_semantics<parallel>], iteration_bounds = array<i64: 1>, scalar_prefetch = 0 : i64, scratch_operands = 0 : i64, tpu.core_type = #tpu.core_type<tc>, window_params = [{pipeline_mode = #tpu.pipeline_mode<synchronous>, transform_indices = @transform_0, window_bounds = array<i64: 1, 128>}, {transform_indices = @transform_1, window_bounds = array<i64: 8, 128>}, {pipeline_mode = #tpu.pipeline_mode<synchronous>, transform_indices = @transform_2, window_bounds = array<i64: 8, 24>}, {pipeline_mode = #tpu.pipeline_mode<synchronous>, transform_indices = @transform_3, window_bounds = array<i64: 8, 1>}, {pipeline_mode = #tpu.pipeline_mode<synchronous>, transform_indices = @transform_4, window_bounds = array<i64: 8, 24>}, {pipeline_mode = #tpu.pipeline_mode<synchronous>, transform_indices = @transform_5, window_bounds = array<i64: 8, 1>}, {pipeline_mode = #tpu.pipeline_mode<synchronous>, transform_indices = @transform_6, window_bounds = array<i64: 8, 8>}, {pipeline_mode = #tpu.pipeline_mode<synchronous>, transform_indices = @transform_7, window_bounds = array<i64: 8, 1>}, {transform_indices = @transform_8, window_bounds = array<i64: 8, 128>}]} {
    %c0 = arith.constant 0 : index
    %c0_0 = arith.constant 0 : index
    %0 = vector.load %arg1[%c0, %c0_0] : memref<1x128xi32, #tpu.memory_space<vmem>>, vector<1x128xi32>
    %c1_i32 = arith.constant 1 : i32
    %1 = vector.broadcast %c1_i32 : i32 to vector<1x128xi32>
    %2 = arith.cmpi sge, %0, %1 : vector<1x128xi32>
    %c15_i32 = arith.constant 15 : i32
    %3 = vector.broadcast %c15_i32 : i32 to vector<1x128xi32>
    %4 = arith.cmpi slt, %0, %3 : vector<1x128xi32>
    %c0_1 = arith.constant 0 : index
    %c0_2 = arith.constant 0 : index
    %5 = vector.load %arg2[%c0_1, %c0_2] : memref<8x128xf32, #tpu.memory_space<vmem>>, vector<8x128xf32>
    %c0_3 = arith.constant 0 : index
    %c0_4 = arith.constant 0 : index
    %6 = vector.load %arg3[%c0_3, %c0_4] : memref<8x24xf32, #tpu.memory_space<vmem>>, vector<8x24xf32>
    %c1_i32_5 = arith.constant 1 : i32
    %7 = tpu.dynamic_rotate %5 by %c1_i32_5 dim 1 : vector<8x128xf32>, i32 -> vector<8x128xf32>
    %cst = arith.constant 0.000000e+00 : f32
    %8 = vector.shape_cast %2 : vector<1x128xi1> to vector<1x128xi1>
    %9 = vector.broadcast %8 : vector<1x128xi1> to vector<8x128xi1>
    %10 = vector.broadcast %cst : f32 to vector<8x128xf32>
    %11 = arith.select %9, %7, %10 : vector<8x128xi1>, vector<8x128xf32>
    %c127_i32 = arith.constant 127 : i32
    %12 = tpu.dynamic_rotate %5 by %c127_i32 dim 1 : vector<8x128xf32>, i32 -> vector<8x128xf32>
    %cst_6 = arith.constant 0.000000e+00 : f32
    %13 = vector.shape_cast %4 : vector<1x128xi1> to vector<1x128xi1>
    %14 = vector.broadcast %13 : vector<1x128xi1> to vector<8x128xi1>
    %15 = vector.broadcast %cst_6 : f32 to vector<8x128xf32>
    %16 = arith.select %14, %12, %15 : vector<8x128xi1>, vector<8x128xf32>
    %17 = tpu.concatenate %11, %5, %16 in 0 : vector<8x128xf32>, vector<8x128xf32>, vector<8x128xf32> -> vector<24x128xf32>
    %cst_7 = arith.constant dense<0.000000e+00> : vector<8x128xf32>
    %18 = tpu.matmul %6, %17, %cst_7 {dimension_numbers = #tpu.dot_dimension_numbers<[1], [0], [0], [1], [0, 0, 1, 1], [], []>} : vector<8x24xf32>, vector<24x128xf32>, vector<8x128xf32> -> vector<8x128xf32>
    %c0_8 = arith.constant 0 : index
    %c0_9 = arith.constant 0 : index
    %19 = vector.load %arg4[%c0_8, %c0_9] : memref<8x1xf32, #tpu.memory_space<vmem>>, vector<8x1xf32>
    %20 = vector.broadcast %19 : vector<8x1xf32> to vector<8x128xf32>
    %21 = arith.addf %18, %20 : vector<8x128xf32>
    %cst_10 = arith.constant 5.000000e-01 : f32
    %22 = vector.broadcast %cst_10 : f32 to vector<8x128xf32>
    %23 = arith.mulf %22, %21 : vector<8x128xf32>
    %cst_11 = arith.constant 0.707106769 : f32
    %24 = vector.broadcast %cst_11 : f32 to vector<8x128xf32>
    %25 = arith.mulf %21, %24 : vector<8x128xf32>
    %cst_12 = arith.constant 0.000000e+00 : f32
    %26 = vector.broadcast %cst_12 : f32 to vector<8x128xf32>
    %27 = arith.cmpf oge, %25, %26 : vector<8x128xf32>
    %cst_13 = arith.constant 1.000000e+00 : f32
    %cst_14 = arith.constant -1.000000e+00 : f32
    %28 = vector.broadcast %cst_13 : f32 to vector<8x128xf32>
    %29 = vector.broadcast %cst_14 : f32 to vector<8x128xf32>
    %30 = arith.select %27, %28, %29 : vector<8x128xi1>, vector<8x128xf32>
    %31 = math.absf %25 : vector<8x128xf32>
    %cst_15 = arith.constant 0.327591091 : f32
    %32 = vector.broadcast %cst_15 : f32 to vector<8x128xf32>
    %33 = arith.mulf %32, %31 : vector<8x128xf32>
    %cst_16 = arith.constant 1.000000e+00 : f32
    %34 = vector.broadcast %cst_16 : f32 to vector<8x128xf32>
    %35 = arith.addf %34, %33 : vector<8x128xf32>
    %cst_17 = arith.constant 1.000000e+00 : f32
    %36 = vector.broadcast %cst_17 : f32 to vector<8x128xf32>
    %37 = arith.divf %36, %35 : vector<8x128xf32>
    %cst_18 = arith.constant 1.06140542 : f32
    %38 = vector.broadcast %cst_18 : f32 to vector<8x128xf32>
    %39 = arith.mulf %38, %37 : vector<8x128xf32>
    %cst_19 = arith.constant -1.45315206 : f32
    %40 = vector.broadcast %cst_19 : f32 to vector<8x128xf32>
    %41 = arith.addf %39, %40 : vector<8x128xf32>
    %42 = arith.mulf %41, %37 : vector<8x128xf32>
    %cst_20 = arith.constant 1.42141378 : f32
    %43 = vector.broadcast %cst_20 : f32 to vector<8x128xf32>
    %44 = arith.addf %42, %43 : vector<8x128xf32>
    %45 = arith.mulf %44, %37 : vector<8x128xf32>
    %cst_21 = arith.constant -0.284496725 : f32
    %46 = vector.broadcast %cst_21 : f32 to vector<8x128xf32>
    %47 = arith.addf %45, %46 : vector<8x128xf32>
    %48 = arith.mulf %47, %37 : vector<8x128xf32>
    %cst_22 = arith.constant 0.254829586 : f32
    %49 = vector.broadcast %cst_22 : f32 to vector<8x128xf32>
    %50 = arith.addf %48, %49 : vector<8x128xf32>
    %51 = arith.mulf %50, %37 : vector<8x128xf32>
    %cst_23 = arith.constant 0.000000e+00 : f32
    %52 = vector.broadcast %cst_23 : f32 to vector<8x128xf32>
    %53 = arith.subf %52, %31 : vector<8x128xf32>
    %54 = arith.mulf %53, %31 : vector<8x128xf32>
    %55 = math.exp %54 : vector<8x128xf32>
    %56 = arith.mulf %51, %55 : vector<8x128xf32>
    %cst_24 = arith.constant 1.000000e+00 : f32
    %57 = vector.broadcast %cst_24 : f32 to vector<8x128xf32>
    %58 = arith.subf %57, %56 : vector<8x128xf32>
    %59 = arith.mulf %30, %58 : vector<8x128xf32>
    %cst_25 = arith.constant 1.000000e+00 : f32
    %60 = vector.broadcast %cst_25 : f32 to vector<8x128xf32>
    %61 = arith.addf %60, %59 : vector<8x128xf32>
    %62 = arith.mulf %23, %61 : vector<8x128xf32>
    %c0_26 = arith.constant 0 : index
    %c0_27 = arith.constant 0 : index
    %63 = vector.load %arg5[%c0_26, %c0_27] : memref<8x24xf32, #tpu.memory_space<vmem>>, vector<8x24xf32>
    %c1_i32_28 = arith.constant 1 : i32
    %64 = tpu.dynamic_rotate %62 by %c1_i32_28 dim 1 : vector<8x128xf32>, i32 -> vector<8x128xf32>
    %cst_29 = arith.constant 0.000000e+00 : f32
    %65 = vector.shape_cast %2 : vector<1x128xi1> to vector<1x128xi1>
    %66 = vector.broadcast %65 : vector<1x128xi1> to vector<8x128xi1>
    %67 = vector.broadcast %cst_29 : f32 to vector<8x128xf32>
    %68 = arith.select %66, %64, %67 : vector<8x128xi1>, vector<8x128xf32>
    %c127_i32_30 = arith.constant 127 : i32
    %69 = tpu.dynamic_rotate %62 by %c127_i32_30 dim 1 : vector<8x128xf32>, i32 -> vector<8x128xf32>
    %cst_31 = arith.constant 0.000000e+00 : f32
    %70 = vector.shape_cast %4 : vector<1x128xi1> to vector<1x128xi1>
    %71 = vector.broadcast %70 : vector<1x128xi1> to vector<8x128xi1>
    %72 = vector.broadcast %cst_31 : f32 to vector<8x128xf32>
    %73 = arith.select %71, %69, %72 : vector<8x128xi1>, vector<8x128xf32>
    %74 = tpu.concatenate %68, %62, %73 in 0 : vector<8x128xf32>, vector<8x128xf32>, vector<8x128xf32> -> vector<24x128xf32>
    %cst_32 = arith.constant dense<0.000000e+00> : vector<8x128xf32>
    %75 = tpu.matmul %63, %74, %cst_32 {dimension_numbers = #tpu.dot_dimension_numbers<[1], [0], [0], [1], [0, 0, 1, 1], [], []>} : vector<8x24xf32>, vector<24x128xf32>, vector<8x128xf32> -> vector<8x128xf32>
    %c0_33 = arith.constant 0 : index
    %c0_34 = arith.constant 0 : index
    %76 = vector.load %arg6[%c0_33, %c0_34] : memref<8x1xf32, #tpu.memory_space<vmem>>, vector<8x1xf32>
    %77 = vector.broadcast %76 : vector<8x1xf32> to vector<8x128xf32>
    %78 = arith.addf %75, %77 : vector<8x128xf32>
    %c0_35 = arith.constant 0 : index
    %c0_36 = arith.constant 0 : index
    %79 = vector.load %arg7[%c0_35, %c0_36] : memref<8x8xf32, #tpu.memory_space<vmem>>, vector<8x8xf32>
    %cst_37 = arith.constant dense<0.000000e+00> : vector<8x128xf32>
    %80 = tpu.matmul %79, %5, %cst_37 {dimension_numbers = #tpu.dot_dimension_numbers<[1], [0], [0], [1], [0, 0, 1, 1], [], []>} : vector<8x8xf32>, vector<8x128xf32>, vector<8x128xf32> -> vector<8x128xf32>
    %c0_38 = arith.constant 0 : index
    %c0_39 = arith.constant 0 : index
    %81 = vector.load %arg8[%c0_38, %c0_39] : memref<8x1xf32, #tpu.memory_space<vmem>>, vector<8x1xf32>
    %82 = vector.broadcast %81 : vector<8x1xf32> to vector<8x128xf32>
    %83 = arith.addf %80, %82 : vector<8x128xf32>
    %84 = arith.addf %78, %83 : vector<8x128xf32>
    %cst_40 = arith.constant 5.000000e-01 : f32
    %85 = vector.broadcast %cst_40 : f32 to vector<8x128xf32>
    %86 = arith.mulf %85, %84 : vector<8x128xf32>
    %cst_41 = arith.constant 0.707106769 : f32
    %87 = vector.broadcast %cst_41 : f32 to vector<8x128xf32>
    %88 = arith.mulf %84, %87 : vector<8x128xf32>
    %cst_42 = arith.constant 0.000000e+00 : f32
    %89 = vector.broadcast %cst_42 : f32 to vector<8x128xf32>
    %90 = arith.cmpf oge, %88, %89 : vector<8x128xf32>
    %cst_43 = arith.constant 1.000000e+00 : f32
    %cst_44 = arith.constant -1.000000e+00 : f32
    %91 = vector.broadcast %cst_43 : f32 to vector<8x128xf32>
    %92 = vector.broadcast %cst_44 : f32 to vector<8x128xf32>
    %93 = arith.select %90, %91, %92 : vector<8x128xi1>, vector<8x128xf32>
    %94 = math.absf %88 : vector<8x128xf32>
    %cst_45 = arith.constant 0.327591091 : f32
    %95 = vector.broadcast %cst_45 : f32 to vector<8x128xf32>
    %96 = arith.mulf %95, %94 : vector<8x128xf32>
    %cst_46 = arith.constant 1.000000e+00 : f32
    %97 = vector.broadcast %cst_46 : f32 to vector<8x128xf32>
    %98 = arith.addf %97, %96 : vector<8x128xf32>
    %cst_47 = arith.constant 1.000000e+00 : f32
    %99 = vector.broadcast %cst_47 : f32 to vector<8x128xf32>
    %100 = arith.divf %99, %98 : vector<8x128xf32>
    %cst_48 = arith.constant 1.06140542 : f32
    %101 = vector.broadcast %cst_48 : f32 to vector<8x128xf32>
    %102 = arith.mulf %101, %100 : vector<8x128xf32>
    %cst_49 = arith.constant -1.45315206 : f32
    %103 = vector.broadcast %cst_49 : f32 to vector<8x128xf32>
    %104 = arith.addf %102, %103 : vector<8x128xf32>
    %105 = arith.mulf %104, %100 : vector<8x128xf32>
    %cst_50 = arith.constant 1.42141378 : f32
    %106 = vector.broadcast %cst_50 : f32 to vector<8x128xf32>
    %107 = arith.addf %105, %106 : vector<8x128xf32>
    %108 = arith.mulf %107, %100 : vector<8x128xf32>
    %cst_51 = arith.constant -0.284496725 : f32
    %109 = vector.broadcast %cst_51 : f32 to vector<8x128xf32>
    %110 = arith.addf %108, %109 : vector<8x128xf32>
    %111 = arith.mulf %110, %100 : vector<8x128xf32>
    %cst_52 = arith.constant 0.254829586 : f32
    %112 = vector.broadcast %cst_52 : f32 to vector<8x128xf32>
    %113 = arith.addf %111, %112 : vector<8x128xf32>
    %114 = arith.mulf %113, %100 : vector<8x128xf32>
    %cst_53 = arith.constant 0.000000e+00 : f32
    %115 = vector.broadcast %cst_53 : f32 to vector<8x128xf32>
    %116 = arith.subf %115, %94 : vector<8x128xf32>
    %117 = arith.mulf %116, %94 : vector<8x128xf32>
    %118 = math.exp %117 : vector<8x128xf32>
    %119 = arith.mulf %114, %118 : vector<8x128xf32>
    %cst_54 = arith.constant 1.000000e+00 : f32
    %120 = vector.broadcast %cst_54 : f32 to vector<8x128xf32>
    %121 = arith.subf %120, %119 : vector<8x128xf32>
    %122 = arith.mulf %93, %121 : vector<8x128xf32>
    %cst_55 = arith.constant 1.000000e+00 : f32
    %123 = vector.broadcast %cst_55 : f32 to vector<8x128xf32>
    %124 = arith.addf %123, %122 : vector<8x128xf32>
    %125 = arith.mulf %86, %124 : vector<8x128xf32>
    %c0_56 = arith.constant 0 : index
    %c0_57 = arith.constant 0 : index
    %126 = vector.load %arg9[%c0_56, %c0_57] : memref<8x128xf32, #tpu.memory_space<vmem>>, vector<8x128xf32>
    tpu.vector_store %arg9[%c0_56, %c0_57], %125 {strides = array<i32>} : memref<8x128xf32, #tpu.memory_space<vmem>>, vector<8x128xf32>,
    return
  }
  func.func @transform_0(%arg0: i32) -> (i32, i32) {
    %c0_i32 = arith.constant 0 : i32
    %c0_i32_0 = arith.constant 0 : i32
    %c0_i32_1 = arith.constant 0 : i32
    return %c0_i32, %c0_i32_0 : i32, i32
  }
  func.func @transform_1(%arg0: i32) -> (i32, i32) {
    %c0_i32 = arith.constant 0 : i32
    %c0_i32_0 = arith.constant 0 : i32
    return %c0_i32, %arg0 : i32, i32
  }
  func.func @transform_2(%arg0: i32) -> (i32, i32) {
    %c0_i32 = arith.constant 0 : i32
    %c0_i32_0 = arith.constant 0 : i32
    %c0_i32_1 = arith.constant 0 : i32
    return %c0_i32, %c0_i32_0 : i32, i32
  }
  func.func @transform_3(%arg0: i32) -> (i32, i32) {
    %c0_i32 = arith.constant 0 : i32
    %c0_i32_0 = arith.constant 0 : i32
    %c0_i32_1 = arith.constant 0 : i32
    return %c0_i32, %c0_i32_0 : i32, i32
  }
  func.func @transform_4(%arg0: i32) -> (i32, i32) {
    %c0_i32 = arith.constant 0 : i32
    %c0_i32_0 = arith.constant 0 : i32
    %c0_i32_1 = arith.constant 0 : i32
    return %c0_i32, %c0_i32_0 : i32, i32
  }
  func.func @transform_5(%arg0: i32) -> (i32, i32) {
    %c0_i32 = arith.constant 0 : i32
    %c0_i32_0 = arith.constant 0 : i32
    %c0_i32_1 = arith.constant 0 : i32
    return %c0_i32, %c0_i32_0 : i32, i32
  }
  func.func @transform_6(%arg0: i32) -> (i32, i32) {
    %c0_i32 = arith.constant 0 : i32
    %c0_i32_0 = arith.constant 0 : i32
    %c0_i32_1 = arith.constant 0 : i32
    return %c0_i32, %c0_i32_0 : i32, i32
  }
  func.func @transform_7(%arg0: i32) -> (i32, i32) {
    %c0_i32 = arith.constant 0 : i32
    %c0_i32_0 = arith.constant 0 : i32
    %c0_i32_1 = arith.constant 0 : i32
    return %c0_i32, %c0_i32_0 : i32, i32
  }
  func.func @transform_8(%arg0: i32) -> (i32, i32) {
    %c0_i32 = arith.constant 0 : i32
    %c0_i32_0 = arith.constant 0 : i32
    return %c0_i32, %arg0 : i32, i32
  }
}

</mosaic_0001>

<llo_original>
// kernel: tpu_custom_call.1
$region0: #{tpu_custom_call.1}
  #allocation0 [shape = 'u32[]', space=smem, size = 0x4, offset = 0x4, fixed_abs, tag = 'smem constant byte address 0x4 - core index']
  #allocation1 [shape = 'u32[72,128]{1,0:T(1,128)}', space=vmem, size = 0x9000, scoped, tag = 'internal scratch']
  %s0 = inlined_call_operand.hbm [shape: f32[8,128], index: 0, kind: input, shape index: {}]
  %s1 = inlined_call_operand.hbm [shape: f32[8,128], index: 1, kind: output, shape index: {}]
  %s2 = sld [smem:[#allocation0]]
  $region18: #{tpu_custom_call.1} parent=0
    _
  %s4 = ssub.s32 1, %s2
  %s5 = scalar_select 0, %s4, %s2
  $region1: #{tpu_custom_call.1} parent=0
    #allocation2 [shape = 'u8[4096]{0}', space=vmem, size = 0x1000, scoped, tag = 'input window, operand 0, single buffered']
    #allocation3 [shape = 's32[1]{0}', space=sflag, size = 0x4, scoped, tag = 'scoped memory for tpu_custom_call.1']
    #allocation4 [shape = 's32[1]{0}', space=sflag, size = 0x4, scoped, tag = 'scoped memory for tpu_custom_call.1']
    #allocation5 [shape = 'u8[4096]{0}', space=vmem, size = 0x1000, scoped, tag = 'output window, operand 0, single buffered']
    %6 = vsyncpa [#allocation3], 0
    %7 = vsyncpa [#allocation4], 0
    // Predicated region
    $region2: #{tpu_custom_call.1} parent=1 // pred_check
      _
    $region3: #{tpu_custom_call.1} parent=1 // pred_check_branch
      %9 = sbr.rel (0) target = $region5
    $region4: #{tpu_custom_call.1} parent=1 // pred_region
      %11 = vsyncadd [#allocation3], 0
      %s13 = sshll.u32 %s0, 4
      %s14 = int_to_ptr.hbm [resolvable:$true] %s13
      %s15 = sshll.u32 [#allocation2], 4
      %s16 = int_to_ptr.vmem [resolvable:$true] %s15
      %18 = dma.hbm_to_vmem [thread:$0]  %s14, 128, %s16, [#allocation3]
    $region5: #{tpu_custom_call.1} parent=1 // pred_fallthru
      _
    // Predicated region
    $region6: #{tpu_custom_call.1} parent=1 // pred_check
      _
    $region7: #{tpu_custom_call.1} parent=1 // pred_check_branch
      %20 = sbr.rel (0) target = $region9
    $region8: #{tpu_custom_call.1} parent=1 // pred_region
      %22 = dma.done [#allocation3], 128
    $region9: #{tpu_custom_call.1} parent=1 // pred_fallthru
      _
    %v23 = vld [vmem:[#allocation2] sm:$0xff]
    %24 = vrot.lane.b32.xlu0 %v23, 1
    %v25 = vpop.permute.xlu0 %24
    %26 = vst [vmem:[#allocation5] sm:$0xff] %v25
    // Predicated region
    $region10: #{tpu_custom_call.1} parent=1 // pred_check
      _
    $region11: #{tpu_custom_call.1} parent=1 // pred_check_branch
      %28 = sbr.rel (0) target = $region13
    $region12: #{tpu_custom_call.1} parent=1 // pred_region
      %30 = vsyncadd [#allocation4], 0
      %s32 = sshll.u32 [#allocation5], 4
      %s33 = int_to_ptr.vmem [resolvable:$true] %s32
      %s34 = sshll.u32 %s1, 4
      %s35 = int_to_ptr.hbm [resolvable:$true] %s34
      %37 = dma.vmem_to_hbm [thread:$0]  %s33, 128, %s35, [#allocation4]
    $region13: #{tpu_custom_call.1} parent=1 // pred_fallthru
      _
    // Predicated region
    $region14: #{tpu_custom_call.1} parent=1 // pred_check
      _
    $region15: #{tpu_custom_call.1} parent=1 // pred_check_branch
      %39 = sbr.rel (0) target = $region17
    $region16: #{tpu_custom_call.1} parent=1 // pred_region
      %41 = dma.done [#allocation4], 128
    $region17: #{tpu_custom_call.1} parent=1 // pred_fallthru
      _
    %42 = vsyncpa [#allocation3], 1
    %43 = vsyncpa [#allocation4], 1

// kernel: tpu_custom_call.1
$region0: #{tpu_custom_call.1}
  #allocation0 [shape = 'u32[]', space=smem, size = 0x4, offset = 0x4, fixed_abs, tag = 'smem constant byte address 0x4 - core index']
  #allocation1 [shape = 'u32[72,128]{1,0:T(1,128)}', space=vmem, size = 0x9000, scoped, tag = 'internal scratch']
  %s0 = inlined_call_operand.vmem [shape: s32[1,128], index: 0, kind: input, shape index: {}]
  %s1 = inlined_call_operand.vmem [shape: f32[8,128], index: 1, kind: input, shape index: {}]
  %s2 = inlined_call_operand.vmem [shape: f32[8,24], index: 2, kind: input, shape index: {}]
  %s3 = inlined_call_operand.vmem [shape: f32[8,1], index: 3, kind: input, shape index: {}]
  %s4 = inlined_call_operand.vmem [shape: f32[8,24], index: 4, kind: input, shape index: {}]
  %s5 = inlined_call_operand.vmem [shape: f32[8,1], index: 5, kind: input, shape index: {}]
  %s6 = inlined_call_operand.hbm [shape: f32[8,8], index: 6, kind: input, shape index: {}]
  %s7 = inlined_call_operand.vmem [shape: f32[8,1], index: 7, kind: input, shape index: {}]
  %s8 = inlined_call_operand.hbm [shape: f32[8,128], index: 8, kind: output, shape index: {}]
  %s9 = sld [smem:[#allocation0]]
  $region46: #{tpu_custom_call.1} parent=0
    _
  %s11 = ssub.s32 1, %s9
  %s12 = scalar_select 0, %s11, %s9
  $region1: #{tpu_custom_call.1} parent=0
    #allocation2 [shape = 'u8[4096]{0}', space=vmem, size = 0x1000, scoped, tag = 'input window, operand 6, single buffered']
    #allocation3 [shape = 's32[1]{0}', space=sflag, size = 0x4, scoped, tag = 'scoped memory for tpu_custom_call.1']
    #allocation4 [shape = 's32[1]{0}', space=sflag, size = 0x4, scoped, tag = 'scoped memory for tpu_custom_call.1']
    #allocation5 [shape = 'u8[4096]{0}', space=vmem, size = 0x1000, scoped, tag = 'output window, operand 0, single buffered']
    %13 = vsyncpa [#allocation3], 0
    %14 = vsyncpa [#allocation4], 0
    // Predicated region
    $region2: #{tpu_custom_call.1} parent=1 // pred_check
      _
    $region3: #{tpu_custom_call.1} parent=1 // pred_check_branch
      %16 = sbr.rel (0) target = $region5
    $region4: #{tpu_custom_call.1} parent=1 // pred_region
      _
    $region5: #{tpu_custom_call.1} parent=1 // pred_fallthru
      _
    // Predicated region
    $region6: #{tpu_custom_call.1} parent=1 // pred_check
      _
    $region7: #{tpu_custom_call.1} parent=1 // pred_check_branch
      %18 = sbr.rel (0) target = $region9
    $region8: #{tpu_custom_call.1} parent=1 // pred_region
      _
    $region9: #{tpu_custom_call.1} parent=1 // pred_fallthru
      _
    // Predicated region
    $region10: #{tpu_custom_call.1} parent=1 // pred_check
      _
    $region11: #{tpu_custom_call.1} parent=1 // pred_check_branch
      %20 = sbr.rel (0) target = $region13
    $region12: #{tpu_custom_call.1} parent=1 // pred_region
      _
    $region13: #{tpu_custom_call.1} parent=1 // pred_fallthru
      _
    // Predicated region
    $region14: #{tpu_custom_call.1} parent=1 // pred_check
      _
    $region15: #{tpu_custom_call.1} parent=1 // pred_check_branch
      %22 = sbr.rel (0) target = $region17
    $region16: #{tpu_custom_call.1} parent=1 // pred_region
      _
    $region17: #{tpu_custom_call.1} parent=1 // pred_fallthru
      _
    // Predicated region
    $region18: #{tpu_custom_call.1} parent=1 // pred_check
      _
    $region19: #{tpu_custom_call.1} parent=1 // pred_check_branch
      %24 = sbr.rel (0) target = $region21
    $region20: #{tpu_custom_call.1} parent=1 // pred_region
      _
    $region21: #{tpu_custom_call.1} parent=1 // pred_fallthru
      _
    // Predicated region
    $region22: #{tpu_custom_call.1} parent=1 // pred_check
      _
    $region23: #{tpu_custom_call.1} parent=1 // pred_check_branch
      %26 = sbr.rel (0) target = $region25
    $region24: #{tpu_custom_call.1} parent=1 // pred_region
      _
    $region25: #{tpu_custom_call.1} parent=1 // pred_fallthru
      _
    // Predicated region
    $region26: #{tpu_custom_call.1} parent=1 // pred_check
      _
    $region27: #{tpu_custom_call.1} parent=1 // pred_check_branch
      %28 = sbr.rel (0) target = $region29
    $region28: #{tpu_custom_call.1} parent=1 // pred_region
      %30 = vsyncadd [#allocation3], 0
      %s32 = sshll.u32 %s6, 4
      %s33 = int_to_ptr.hbm [resolvable:$true] %s32
      %s34 = sshll.u32 [#allocation2], 4
      %s35 = int_to_ptr.vmem [resolvable:$true] %s34
      %37 = dma.hbm_to_vmem [thread:$0]  %s33, 128, %s35, [#allocation3]
    $region29: #{tpu_custom_call.1} parent=1 // pred_fallthru
      _
    // Predicated region
    $region30: #{tpu_custom_call.1} parent=1 // pred_check
      _
    $region31: #{tpu_custom_call.1} parent=1 // pred_check_branch
      %39 = sbr.rel (0) target = $region33
    $region32: #{tpu_custom_call.1} parent=1 // pred_region
      _
    $region33: #{tpu_custom_call.1} parent=1 // pred_fallthru
      _
    // Predicated region
    $region34: #{tpu_custom_call.1} parent=1 // pred_check
      _
    $region35: #{tpu_custom_call.1} parent=1 // pred_check_branch
      %41 = sbr.rel (0) target = $region37
    $region36: #{tpu_custom_call.1} parent=1 // pred_region
      %43 = dma.done [#allocation3], 128
    $region37: #{tpu_custom_call.1} parent=1 // pred_fallthru
      _
    %v44 = vld [vmem:[%s0] sm:$0x1]
    %vm45 = vcmp.ge.s32.totalorder %v44, 1
    %vm46 = vcmp.lt.s32.totalorder %v44, 15
    %v47 = vld [vmem:[%s1] sm:$0xff]
    %v48 = vld [vmem:[%s2] sm:$0xff]
    %49 = vrot.lane.b32.xlu0 %v47, 1
    %v50 = vpop.permute.xlu0 %49
    %v51 = vsel %vm45, 1, 0
    %v52 = vperm.slane %v51, 0
    %vm53 = vcmp.eq.s32.totalorder %v52, 1
    %v54 = vsel %vm53, %v50, 0.0
    %55 = vrot.lane.b32.xlu0 %v47, 127
    %v56 = vpop.permute.xlu0 %55
    %v57 = vsel %vm46, 1, 0
    %v58 = vperm.slane %v57, 0
    %vm59 = vcmp.eq.s32.totalorder %v58, 1
    %v60 = vsel %vm59, %v56, 0.0
    %v61 = vld [vmem:[%s3] sm:$0xff]
    %63 = vset.pattern.permute.xlu0 0
    %64 = vperm.xlu0 %63, %v61
    %v65 = vpop.permute.xlu0 %64
    %vm67 = vcmask 195584
    %v69 = vsel %vm67, %v48, 0
    %71 = vmatpush.msra.mxu0 0.0
    %72 = vmatpush.msra.mxu0 0.0
    %73 = vmatpush.msra.mxu0 0.0
    %74 = vmatpush.msra.mxu0 0.0
    %75 = vmatpush.msra.mxu0 0.0
    %76 = vmatpush.msra.mxu0 0.0
    %77 = vmatpush.msra.mxu0 0.0
    %78 = vmatpush.msra.mxu0 0.0
    %79 = vmatpush.msra.mxu0 0.0
    %80 = vmatpush.msra.mxu0 0.0
    %81 = vmatpush.msra.mxu0 0.0
    %82 = vmatpush.msra.mxu0 0.0
    %83 = vmatpush.msra.mxu0 0.0
    %84 = vmatpush.msra.mxu0 %v60
    %85 = vmatpush.msra.mxu0 %v47
    %86 = vmatpush.msra.mxu0 %v54
    %87 = vmatmul.f32.gmra.mxu0 %v69
    %v88 = vpop.f32.mrf.mxu0
    %v89 = vadd.f32 %v65, %v88
    %90 = vdwg.mxu0
    %v91 = vmul.f32 %v89, 0.5
    %v92 = vmul.f32 %v89, 0.70710677
    %vm93 = vcmp.ge.f32.partialorder %v92, 0.0
    %v94 = vsel %vm93, 1.0, -1.0
    %v95 = vand.u32 2147483647, %v92
    %v96 = vmul.f32 %v95, 0.3275911
    %v97 = vadd.f32 %v96, 1.0
    %v98 = vrcp.pop %v97
    %v99 = vmul.f32 %v97, %v98
    %v100 = vsub.f32 1.0, %v99
    %v101 = vmul.f32 %v98, %v100
    %v102 = vadd.f32 %v98, %v101
    %vm103 = vweird.f32 %v97
    %vm104 = vweird.f32 %v98
    %vm105 = vmor %vm103, %vm104
    %v106 = vsel %vm105, %v98, %v102
    %v107 = vand.u32 2147483647, %v97
    %vm108 = vcmp.eq.f32.partialorder %v107, 8.507059e+37
    %v109 = vand.u32 %v97, 2147483648
    %v110 = vor.u32 1.1754944e-38, %v109
    %v111 = vsel %vm108, %v110, %v106
    %v112 = vmul.f32 1.0, %v111
    %v113 = vmul.f32 %v112, 1.0614054
    %v114 = vadd.f32 %v113, -1.4531521
    %v115 = vmul.f32 %v114, %v112
    %v116 = vadd.f32 %v115, 1.4214138
    %v117 = vmul.f32 %v116, %v112
    %v118 = vadd.f32 %v117, -0.28449672
    %v119 = vmul.f32 %v118, %v112
    %v120 = vadd.f32 %v119, 0.2548296
    %v121 = vmul.f32 %v120, %v112
    %v122 = vsub.f32 0.0, %v95
    %v123 = vmul.f32 %v122, %v95
    %v124 = vmul.f32 %v123, 1.442695
    %v125 = vpow.pop %v124
    %v126 = vmul.f32 %v121, %v125
    %v127 = vsub.f32 1.0, %v126
    %v128 = vmul.f32 %v94, %v127
    %v129 = vadd.f32 %v128, 1.0
    %v130 = vmul.f32 %v91, %v129
    %v131 = vld [vmem:[%s4] sm:$0xff]
    %132 = vrot.lane.b32.xlu0 %v130, 1
    %v133 = vpop.permute.xlu0 %132
    %v134 = vsel %vm53, %v133, 0.0
    %135 = vrot.lane.b32.xlu0 %v130, 127
    %v136 = vpop.permute.xlu0 %135
    %v137 = vsel %vm59, %v136, 0.0
    %v138 = vld [vmem:[%s5] sm:$0xff]
    %140 = vset.pattern.permute.xlu0 0
    %141 = vperm.xlu0 %140, %v138
    %v142 = vpop.permute.xlu0 %141
    %v145 = vsel %vm67, %v131, 0
    %147 = vmatpush.msra.mxu0 0.0
    %148 = vmatpush.msra.mxu0 0.0
    %149 = vmatpush.msra.mxu0 0.0
    %150 = vmatpush.msra.mxu0 0.0
    %151 = vmatpush.msra.mxu0 0.0
    %152 = vmatpush.msra.mxu0 0.0
    %153 = vmatpush.msra.mxu0 0.0
    %154 = vmatpush.msra.mxu0 0.0
    %155 = vmatpush.msra.mxu0 0.0
    %156 = vmatpush.msra.mxu0 0.0
    %157 = vmatpush.msra.mxu0 0.0
    %158 = vmatpush.msra.mxu0 0.0
    %159 = vmatpush.msra.mxu0 0.0
    %160 = vmatpush.msra.mxu0 %v137
    %161 = vmatpush.msra.mxu0 %v130
    %162 = vmatpush.msra.mxu0 %v134
    %163 = vmatmul.f32.gmra.mxu0 %v145
    %v164 = vpop.f32.mrf.mxu0
    %v165 = vadd.f32 %v142, %v164
    %166 = vdwg.mxu0
    %v167 = vld [vmem:[#allocation2] sm:$0xff]
    %v168 = vld [vmem:[%s7] sm:$0xff]
    %170 = vset.pattern.permute.xlu0 0
    %171 = vperm.xlu0 %170, %v168
    %v172 = vpop.permute.xlu0 %171
    %vm174 = vcmask 64512
    %v176 = vsel %vm174, %v167, 0
    %178 = vmatpush.msra.mxu0 0.0
    %179 = vmatpush.msra.mxu0 0.0
    %180 = vmatpush.msra.mxu0 0.0
    %181 = vmatpush.msra.mxu0 0.0
    %182 = vmatpush.msra.mxu0 0.0
    %183 = vmatpush.msra.mxu0 0.0
    %184 = vmatpush.msra.mxu0 0.0
    %185 = vmatpush.msra.mxu0 0.0
    %186 = vmatpush.msra.mxu0 0.0
    %187 = vmatpush.msra.mxu0 0.0
    %188 = vmatpush.msra.mxu0 0.0
    %189 = vmatpush.msra.mxu0 0.0
    %190 = vmatpush.msra.mxu0 0.0
    %191 = vmatpush.msra.mxu0 0.0
    %192 = vmatpush.msra.mxu0 0.0
    %193 = vmatpush.msra.mxu0 %v47
    %194 = vmatmul.f32.gmra.mxu0 %v176
    %v195 = vpop.f32.mrf.mxu0
    %v196 = vadd.f32 %v172, %v195
    %197 = vdwg.mxu0
    %v198 = vadd.f32 %v165, %v196
    %v199 = vmul.f32 %v198, 0.5
    %v200 = vmul.f32 %v198, 0.70710677
    %vm201 = vcmp.ge.f32.partialorder %v200, 0.0
    %v202 = vsel %vm201, 1.0, -1.0
    %v203 = vand.u32 2147483647, %v200
    %v204 = vmul.f32 %v203, 0.3275911
    %v205 = vadd.f32 %v204, 1.0
    %v206 = vrcp.pop %v205
    %v207 = vmul.f32 %v205, %v206
    %v208 = vsub.f32 1.0, %v207
    %v209 = vmul.f32 %v206, %v208
    %v210 = vadd.f32 %v206, %v209
    %vm211 = vweird.f32 %v205
    %vm212 = vweird.f32 %v206
    %vm213 = vmor %vm211, %vm212
    %v214 = vsel %vm213, %v206, %v210
    %v215 = vand.u32 2147483647, %v205
    %vm216 = vcmp.eq.f32.partialorder %v215, 8.507059e+37
    %v217 = vand.u32 %v205, 2147483648
    %v218 = vor.u32 1.1754944e-38, %v217
    %v219 = vsel %vm216, %v218, %v214
    %v220 = vmul.f32 1.0, %v219
    %v221 = vmul.f32 %v220, 1.0614054
    %v222 = vadd.f32 %v221, -1.4531521
    %v223 = vmul.f32 %v222, %v220
    %v224 = vadd.f32 %v223, 1.4214138
    %v225 = vmul.f32 %v224, %v220
    %v226 = vadd.f32 %v225, -0.28449672
    %v227 = vmul.f32 %v226, %v220
    %v228 = vadd.f32 %v227, 0.2548296
    %v229 = vmul.f32 %v228, %v220
    %v230 = vsub.f32 0.0, %v203
    %v231 = vmul.f32 %v230, %v203
    %v232 = vmul.f32 %v231, 1.442695
    %v233 = vpow.pop %v232
    %v234 = vmul.f32 %v229, %v233
    %v235 = vsub.f32 1.0, %v234
    %v236 = vmul.f32 %v202, %v235
    %v237 = vadd.f32 %v236, 1.0
    %v238 = vmul.f32 %v199, %v237
    %239 = vst [vmem:[#allocation5] sm:$0xff] %v238
    // Predicated region
    $region38: #{tpu_custom_call.1} parent=1 // pred_check
      _
    $region39: #{tpu_custom_call.1} parent=1 // pred_check_branch
      %241 = sbr.rel (0) target = $region41
    $region40: #{tpu_custom_call.1} parent=1 // pred_region
      %243 = vsyncadd [#allocation4], 0
      %s245 = sshll.u32 [#allocation5], 4
      %s246 = int_to_ptr.vmem [resolvable:$true] %s245
      %s247 = sshll.u32 %s8, 4
      %s248 = int_to_ptr.hbm [resolvable:$true] %s247
      %250 = dma.vmem_to_hbm [thread:$0]  %s246, 128, %s248, [#allocation4]
    $region41: #{tpu_custom_call.1} parent=1 // pred_fallthru
      _
    // Predicated region
    $region42: #{tpu_custom_call.1} parent=1 // pred_check
      _
    $region43: #{tpu_custom_call.1} parent=1 // pred_check_branch
      %252 = sbr.rel (0) target = $region45
    $region44: #{tpu_custom_call.1} parent=1 // pred_region
      %254 = dma.done [#allocation4], 128
    $region45: #{tpu_custom_call.1} parent=1 // pred_fallthru
      _
    %255 = vsyncpa [#allocation3], 1
    %256 = vsyncpa [#allocation4], 1

</llo_original>
